<compile_context>
chip_gen: v7x
topology: tpu7x:2x2x1
jax: 0.10.0
libtpu: 0.0.40
codegen_flags: <defaults>
</compile_context>

<pallas_src>
import math
import functools

import jax
import jax.numpy as jnp
from jax.experimental import pallas as pl
from jax.experimental.pallas import tpu as pltpu

# Small synthetic sizes (original: in=1536, hid=3072, out=3129, num_layers=3)
INPUT_SIZE = 32
HIDDEN_SIZE = 64
OUTPUT_SIZE = 48
BATCH = 16

LANE = 128                      # TPU lane width; output padded to a multiple of this
_INV_SQRT2 = 1.0 / math.sqrt(2.0)
_LN_EPS = 1e-5                  # nn.LayerNorm default


def _round_up(n, m):
    return ((n + m - 1) // m) * m


def _gelu_exact(x):
    # nn.GELU() default (approximate='none'): 0.5*x*(1 + erf(x/sqrt(2)))
    return 0.5 * x * (1.0 + jax.lax.erf(x * _INV_SQRT2))


def decoder_kernel(x_ref, w1_ref, b1_ref, g_ref, beta_ref,
                   w2_ref, b2_ref, w3_ref, b3_ref, o_ref):
    x = x_ref[...]                                                   # (B, in)

    # --- Linear(in, hid) ---
    h = jnp.dot(x, w1_ref[...], preferred_element_type=jnp.float32) + b1_ref[...]

    # --- LayerNorm(hid) (biased variance, eps=1e-5, affine) ---
    mu = jnp.mean(h, axis=-1, keepdims=True)
    var = jnp.mean(jnp.square(h - mu), axis=-1, keepdims=True)
    h = (h - mu) * jax.lax.rsqrt(var + _LN_EPS)
    h = h * g_ref[...] + beta_ref[...]

    # --- GELU (exact erf, matching nn.GELU default) ---
    h = _gelu_exact(h)

    # --- Linear(hid, hid) -> GELU ---
    h = jnp.dot(h, w2_ref[...], preferred_element_type=jnp.float32) + b2_ref[...]
    h = _gelu_exact(h)

    # --- Linear(hid, out_padded); padded columns of w3/b3 are zero ---
    o_ref[...] = jnp.dot(h, w3_ref[...], preferred_element_type=jnp.float32) + b3_ref[...]


@jax.jit
def decoder_forward(x, params):
    w1, b1, gamma, beta, w2, b2, w3, b3 = params
    b, d_in = x.shape
    d_out = w3.shape[1]

    # Pad the output feature dim to a lane-dense multiple of 128 so the final
    # store is an unmasked vst; padded weight/bias columns are zero.
    d_out_p = _round_up(d_out, LANE)
    pad = d_out_p - d_out
    w3p = jnp.pad(w3, ((0, 0), (0, pad)))
    b3p = jnp.pad(b3, ((0, 0), (0, pad)))

    # Single kernel invocation (no grid): the whole batch and all weights live in
    # VMEM for the duration of the call (fine at these toy sizes).
    out_p = pl.pallas_call(
        decoder_kernel,
        out_shape=jax.ShapeDtypeStruct((b, d_out_p), jnp.float32),
    )(x, w1, b1, gamma, beta, w2, b2, w3p, b3p)

    return out_p[:, :d_out]


def init_params(key):
    ks = jax.random.split(key, 6)
    scale1 = 1.0 / math.sqrt(INPUT_SIZE)
    scale2 = 1.0 / math.sqrt(HIDDEN_SIZE)
    w1 = jax.random.uniform(ks[0], (INPUT_SIZE, HIDDEN_SIZE), jnp.float32, -scale1, scale1)
    b1 = jax.random.uniform(ks[1], (1, HIDDEN_SIZE), jnp.float32, -scale1, scale1)
    gamma = jnp.ones((1, HIDDEN_SIZE), jnp.float32)   # LayerNorm init
    beta = jnp.zeros((1, HIDDEN_SIZE), jnp.float32)
    w2 = jax.random.uniform(ks[2], (HIDDEN_SIZE, HIDDEN_SIZE), jnp.float32, -scale2, scale2)
    b2 = jax.random.uniform(ks[3], (1, HIDDEN_SIZE), jnp.float32, -scale2, scale2)
    w3 = jax.random.uniform(ks[4], (HIDDEN_SIZE, OUTPUT_SIZE), jnp.float32, -scale2, scale2)
    b3 = jax.random.uniform(ks[5], (1, OUTPUT_SIZE), jnp.float32, -scale2, scale2)
    return (w1, b1, gamma, beta, w2, b2, w3, b3)


def reference_forward(x, params):
    w1, b1, gamma, beta, w2, b2, w3, b3 = params
    h = x @ w1 + b1
    mu = jnp.mean(h, axis=-1, keepdims=True)
    var = jnp.mean(jnp.square(h - mu), axis=-1, keepdims=True)
    h = (h - mu) / jnp.sqrt(var + _LN_EPS) * gamma + beta
    h = jax.nn.gelu(h, approximate=False)
    h = jax.nn.gelu(h @ w2 + b2, approximate=False)
    return h @ w3 + b3


if __name__ == "__main__":
    key = jax.random.PRNGKey(0)
    k_x, k_p = jax.random.split(key)
    x = jax.random.normal(k_x, (BATCH, INPUT_SIZE), jnp.float32)
    params = init_params(k_p)

    out = decoder_forward(x, params)
    out = jax.block_until_ready(out)

    ref = reference_forward(x, params)
    assert out.shape == (BATCH, OUTPUT_SIZE)
    assert jnp.allclose(out, ref, atol=1e-4, rtol=1e-4), "mismatch vs JAX reference"

    print("KERNEL_OK")
</pallas_src>

<mosaic_0001>
module attributes {stable_mosaic.version = 11 : i64} {
  func.func @decoder_kernel(%arg0: memref<16x32xf32, #tpu.memory_space<vmem>>, %arg1: memref<32x64xf32, #tpu.memory_space<vmem>>, %arg2: memref<1x64xf32, #tpu.memory_space<vmem>>, %arg3: memref<1x64xf32, #tpu.memory_space<vmem>>, %arg4: memref<1x64xf32, #tpu.memory_space<vmem>>, %arg5: memref<64x64xf32, #tpu.memory_space<vmem>>, %arg6: memref<1x64xf32, #tpu.memory_space<vmem>>, %arg7: memref<64x128xf32, #tpu.memory_space<vmem>>, %arg8: memref<1x128xf32, #tpu.memory_space<vmem>>, %arg9: memref<16x128xf32, #tpu.memory_space<vmem>>) attributes {dimension_semantics = [], scalar_prefetch = 0 : i64, scratch_operands = 0 : i64, tpu.core_type = #tpu.core_type<tc>} {
    %c0 = arith.constant 0 : index
    %c0_0 = arith.constant 0 : index
    %0 = vector.load %arg0[%c0, %c0_0] : memref<16x32xf32, #tpu.memory_space<vmem>>, vector<16x32xf32>
    %c0_1 = arith.constant 0 : index
    %c0_2 = arith.constant 0 : index
    %1 = vector.load %arg1[%c0_1, %c0_2] : memref<32x64xf32, #tpu.memory_space<vmem>>, vector<32x64xf32>
    %cst = arith.constant dense<0.000000e+00> : vector<16x64xf32>
    %2 = tpu.matmul %0, %1, %cst {dimension_numbers = #tpu.dot_dimension_numbers<[1], [0], [0], [1], [0, 0, 1, 1], [], []>} : vector<16x32xf32>, vector<32x64xf32>, vector<16x64xf32> -> vector<16x64xf32>
    %c0_3 = arith.constant 0 : index
    %c0_4 = arith.constant 0 : index
    %3 = vector.load %arg2[%c0_3, %c0_4] : memref<1x64xf32, #tpu.memory_space<vmem>>, vector<1x64xf32>
    %4 = vector.broadcast %3 : vector<1x64xf32> to vector<16x64xf32>
    %5 = arith.addf %2, %4 : vector<16x64xf32>
    %cst_5 = arith.constant dense<0.000000e+00> : vector<16xf32>
    %6 = vector.multi_reduction <add>, %5, %cst_5 [1] : vector<16x64xf32> to vector<16xf32>
    %7 = vector.shape_cast %6 : vector<16xf32> to vector<16x1xf32>
    %cst_6 = arith.constant 6.400000e+01 : f32
    %8 = vector.broadcast %cst_6 : f32 to vector<16x1xf32>
    %9 = arith.divf %7, %8 : vector<16x1xf32>
    %10 = vector.broadcast %9 : vector<16x1xf32> to vector<16x64xf32>
    %11 = arith.subf %5, %10 : vector<16x64xf32>
    %12 = arith.mulf %11, %11 : vector<16x64xf32>
    %cst_7 = arith.constant dense<0.000000e+00> : vector<16xf32>
    %13 = vector.multi_reduction <add>, %12, %cst_7 [1] : vector<16x64xf32> to vector<16xf32>
    %14 = vector.shape_cast %13 : vector<16xf32> to vector<16x1xf32>
    %cst_8 = arith.constant 6.400000e+01 : f32
    %15 = vector.broadcast %cst_8 : f32 to vector<16x1xf32>
    %16 = arith.divf %14, %15 : vector<16x1xf32>
    %17 = vector.broadcast %9 : vector<16x1xf32> to vector<16x64xf32>
    %18 = arith.subf %5, %17 : vector<16x64xf32>
    %cst_9 = arith.constant 9.99999974E-6 : f32
    %19 = vector.broadcast %cst_9 : f32 to vector<16x1xf32>
    %20 = arith.addf %16, %19 : vector<16x1xf32>
    %21 = math.rsqrt %20 : vector<16x1xf32>
    %22 = vector.broadcast %21 : vector<16x1xf32> to vector<16x64xf32>
    %23 = arith.mulf %18, %22 : vector<16x64xf32>
    %c0_10 = arith.constant 0 : index
    %c0_11 = arith.constant 0 : index
    %24 = vector.load %arg3[%c0_10, %c0_11] : memref<1x64xf32, #tpu.memory_space<vmem>>, vector<1x64xf32>
    %25 = vector.broadcast %24 : vector<1x64xf32> to vector<16x64xf32>
    %26 = arith.mulf %23, %25 : vector<16x64xf32>
    %c0_12 = arith.constant 0 : index
    %c0_13 = arith.constant 0 : index
    %27 = vector.load %arg4[%c0_12, %c0_13] : memref<1x64xf32, #tpu.memory_space<vmem>>, vector<1x64xf32>
    %28 = vector.broadcast %27 : vector<1x64xf32> to vector<16x64xf32>
    %29 = arith.addf %26, %28 : vector<16x64xf32>
    %cst_14 = arith.constant 5.000000e-01 : f32
    %30 = vector.broadcast %cst_14 : f32 to vector<16x64xf32>
    %31 = arith.mulf %30, %29 : vector<16x64xf32>
    %cst_15 = arith.constant 0.707106769 : f32
    %32 = vector.broadcast %cst_15 : f32 to vector<16x64xf32>
    %33 = arith.mulf %29, %32 : vector<16x64xf32>
    %34 = math.erf %33 : vector<16x64xf32>
    %cst_16 = arith.constant 1.000000e+00 : f32
    %35 = vector.broadcast %cst_16 : f32 to vector<16x64xf32>
    %36 = arith.addf %35, %34 : vector<16x64xf32>
    %37 = arith.mulf %31, %36 : vector<16x64xf32>
    %c0_17 = arith.constant 0 : index
    %c0_18 = arith.constant 0 : index
    %38 = vector.load %arg5[%c0_17, %c0_18] : memref<64x64xf32, #tpu.memory_space<vmem>>, vector<64x64xf32>
    %cst_19 = arith.constant dense<0.000000e+00> : vector<16x64xf32>
    %39 = tpu.matmul %37, %38, %cst_19 {dimension_numbers = #tpu.dot_dimension_numbers<[1], [0], [0], [1], [0, 0, 1, 1], [], []>} : vector<16x64xf32>, vector<64x64xf32>, vector<16x64xf32> -> vector<16x64xf32>
    %c0_20 = arith.constant 0 : index
    %c0_21 = arith.constant 0 : index
    %40 = vector.load %arg6[%c0_20, %c0_21] : memref<1x64xf32, #tpu.memory_space<vmem>>, vector<1x64xf32>
    %41 = vector.broadcast %40 : vector<1x64xf32> to vector<16x64xf32>
    %42 = arith.addf %39, %41 : vector<16x64xf32>
    %cst_22 = arith.constant 5.000000e-01 : f32
    %43 = vector.broadcast %cst_22 : f32 to vector<16x64xf32>
    %44 = arith.mulf %43, %42 : vector<16x64xf32>
    %cst_23 = arith.constant 0.707106769 : f32
    %45 = vector.broadcast %cst_23 : f32 to vector<16x64xf32>
    %46 = arith.mulf %42, %45 : vector<16x64xf32>
    %47 = math.erf %46 : vector<16x64xf32>
    %cst_24 = arith.constant 1.000000e+00 : f32
    %48 = vector.broadcast %cst_24 : f32 to vector<16x64xf32>
    %49 = arith.addf %48, %47 : vector<16x64xf32>
    %50 = arith.mulf %44, %49 : vector<16x64xf32>
    %c0_25 = arith.constant 0 : index
    %c0_26 = arith.constant 0 : index
    %51 = vector.load %arg7[%c0_25, %c0_26] : memref<64x128xf32, #tpu.memory_space<vmem>>, vector<64x128xf32>
    %cst_27 = arith.constant dense<0.000000e+00> : vector<16x128xf32>
    %52 = tpu.matmul %50, %51, %cst_27 {dimension_numbers = #tpu.dot_dimension_numbers<[1], [0], [0], [1], [0, 0, 1, 1], [], []>} : vector<16x64xf32>, vector<64x128xf32>, vector<16x128xf32> -> vector<16x128xf32>
    %c0_28 = arith.constant 0 : index
    %c0_29 = arith.constant 0 : index
    %53 = vector.load %arg8[%c0_28, %c0_29] : memref<1x128xf32, #tpu.memory_space<vmem>>, vector<1x128xf32>
    %54 = vector.broadcast %53 : vector<1x128xf32> to vector<16x128xf32>
    %55 = arith.addf %52, %54 : vector<16x128xf32>
    %c0_30 = arith.constant 0 : index
    %c0_31 = arith.constant 0 : index
    %56 = vector.load %arg9[%c0_30, %c0_31] : memref<16x128xf32, #tpu.memory_space<vmem>>, vector<16x128xf32>
    tpu.vector_store %arg9[%c0_30, %c0_31], %55 {strides = array<i32>} : memref<16x128xf32, #tpu.memory_space<vmem>>, vector<16x128xf32>,
    return
  }
}

</mosaic_0001>

<llo_original>
// kernel: decoder_forward.1
$region0: #{decoder_forward.1}
  #allocation0 [shape = 'u32[]', space=smem, size = 0x4, offset = 0x4, fixed_abs, tag = 'smem constant byte address 0x4 - core index']
  #allocation1 [shape = 'u32[144,128]{1,0:T(1,128)}', space=vmem, size = 0x12000, scoped, tag = 'internal scratch']
  %s0 = inlined_call_operand.vmem [shape: f32[16,32], index: 0, kind: input, shape index: {}]
  %s1 = inlined_call_operand.vmem [shape: f32[32,64], index: 1, kind: input, shape index: {}]
  %s2 = inlined_call_operand.vmem [shape: f32[1,64], index: 2, kind: input, shape index: {}]
  %s3 = inlined_call_operand.vmem [shape: f32[1,64], index: 3, kind: input, shape index: {}]
  %s4 = inlined_call_operand.vmem [shape: f32[1,64], index: 4, kind: input, shape index: {}]
  %s5 = inlined_call_operand.vmem [shape: f32[64,64], index: 5, kind: input, shape index: {}]
  %s6 = inlined_call_operand.vmem [shape: f32[1,64], index: 6, kind: input, shape index: {}]
  %s7 = inlined_call_operand.vmem [shape: f32[64,128], index: 7, kind: input, shape index: {}]
  %s8 = inlined_call_operand.vmem [shape: f32[1,128], index: 8, kind: input, shape index: {}]
  %s9 = inlined_call_operand.hbm [shape: f32[16,128], index: 9, kind: output, shape index: {}]
  %s10 = sld [smem:[#allocation0]]
  $region46: #{decoder_forward.1} parent=0
    _
  %s12 = ssub.s32 1, %s10
  %s13 = scalar_select 0, %s12, %s10
  $region1: #{decoder_forward.1} parent=0
    #allocation2 [shape = 'u8[8192]{0}', space=vmem, size = 0x2000, scoped, tag = 'output window, operand 0, single buffered']
    #allocation3 [shape = 's32[1]{0}', space=sflag, size = 0x4, scoped, tag = 'scoped memory for decoder_forward.1']
    %14 = vsyncpa [#allocation3], 0
    // Predicated region
    $region2: #{decoder_forward.1} parent=1 // pred_check
      _
    $region3: #{decoder_forward.1} parent=1 // pred_check_branch
      %16 = sbr.rel (0) target = $region5
    $region4: #{decoder_forward.1} parent=1 // pred_region
      _
    $region5: #{decoder_forward.1} parent=1 // pred_fallthru
      _
    // Predicated region
    $region6: #{decoder_forward.1} parent=1 // pred_check
      _
    $region7: #{decoder_forward.1} parent=1 // pred_check_branch
      %18 = sbr.rel (0) target = $region9
    $region8: #{decoder_forward.1} parent=1 // pred_region
      _
    $region9: #{decoder_forward.1} parent=1 // pred_fallthru
      _
    // Predicated region
    $region10: #{decoder_forward.1} parent=1 // pred_check
      _
    $region11: #{decoder_forward.1} parent=1 // pred_check_branch
      %20 = sbr.rel (0) target = $region13
    $region12: #{decoder_forward.1} parent=1 // pred_region
      _
    $region13: #{decoder_forward.1} parent=1 // pred_fallthru
      _
    // Predicated region
    $region14: #{decoder_forward.1} parent=1 // pred_check
      _
    $region15: #{decoder_forward.1} parent=1 // pred_check_branch
      %22 = sbr.rel (0) target = $region17
    $region16: #{decoder_forward.1} parent=1 // pred_region
      _
    $region17: #{decoder_forward.1} parent=1 // pred_fallthru
      _
    // Predicated region
    $region18: #{decoder_forward.1} parent=1 // pred_check
      _
    $region19: #{decoder_forward.1} parent=1 // pred_check_branch
      %24 = sbr.rel (0) target = $region21
    $region20: #{decoder_forward.1} parent=1 // pred_region
      _
    $region21: #{decoder_forward.1} parent=1 // pred_fallthru
      _
    // Predicated region
    $region22: #{decoder_forward.1} parent=1 // pred_check
      _
    $region23: #{decoder_forward.1} parent=1 // pred_check_branch
      %26 = sbr.rel (0) target = $region25
    $region24: #{decoder_forward.1} parent=1 // pred_region
      _
    $region25: #{decoder_forward.1} parent=1 // pred_fallthru
      _
    // Predicated region
    $region26: #{decoder_forward.1} parent=1 // pred_check
      _
    $region27: #{decoder_forward.1} parent=1 // pred_check_branch
      %28 = sbr.rel (0) target = $region29
    $region28: #{decoder_forward.1} parent=1 // pred_region
      _
    $region29: #{decoder_forward.1} parent=1 // pred_fallthru
      _
    // Predicated region
    $region30: #{decoder_forward.1} parent=1 // pred_check
      _
    $region31: #{decoder_forward.1} parent=1 // pred_check_branch
      %30 = sbr.rel (0) target = $region33
    $region32: #{decoder_forward.1} parent=1 // pred_region
      _
    $region33: #{decoder_forward.1} parent=1 // pred_fallthru
      _
    // Predicated region
    $region34: #{decoder_forward.1} parent=1 // pred_check
      _
    $region35: #{decoder_forward.1} parent=1 // pred_check_branch
      %32 = sbr.rel (0) target = $region37
    $region36: #{decoder_forward.1} parent=1 // pred_region
      _
    $region37: #{decoder_forward.1} parent=1 // pred_fallthru
      _
    %v33 = vld [vmem:[%s0] sm:$0xff]
    %v34 = vld [vmem:[%s0 + $0x8] sm:$0xff]
    %v35 = vld [vmem:[%s1] sm:$0xff]
    %v36 = vld [vmem:[%s1 + $0x8] sm:$0xff]
    %v37 = vld [vmem:[%s1 + $0x10] sm:$0xff]
    %v38 = vld [vmem:[%s1 + $0x18] sm:$0xff]
    %v39 = vld [vmem:[%s2] sm:$0x1]
    %v41 = vlaneseq
    %v42 = vshrl.u32 %v41, 7
    %v43 = vsub.s32 0, %v42
    %v44 = vrot.slane %v39, %v43
    %vm46 = vcmask 261120
    %v48 = vsel %vm46, %v33, 0
    %v51 = vsel %vm46, %v34, 0
    %53 = vmatprep.subr.mxu0 0.0
    %54 = vmatpush1.msra.mxu0 %v35
    %55 = vmatprep.subr.mxu0 0.0
    %56 = vmatpush1.msra.mxu0 %v36
    %57 = vmatprep.subr.mxu0 0.0
    %58 = vmatpush1.msra.mxu0 %v37
    %59 = vmatprep.subr.mxu0 0.0
    %60 = vmatpush1.msra.mxu0 %v38
    %61 = vmatprep.subr.mxu0 0.0
    %62 = vmatpush1.msra.mxu0 0.0
    %63 = vmatprep.subr.mxu0 0.0
    %64 = vmatpush1.msra.mxu0 0.0
    %65 = vmatprep.subr.mxu0 0.0
    %66 = vmatpush1.msra.mxu0 0.0
    %67 = vmatprep.subr.mxu0 0.0
    %68 = vmatpush1.msra.mxu0 0.0
    %69 = vmatprep.subr.mxu0 0.0
    %70 = vmatpush1.msra.mxu0 0.0
    %71 = vmatprep.subr.mxu0 0.0
    %72 = vmatpush1.msra.mxu0 0.0
    %73 = vmatprep.subr.mxu0 0.0
    %74 = vmatpush1.msra.mxu0 0.0
    %75 = vmatprep.subr.mxu0 0.0
    %76 = vmatpush1.msra.mxu0 0.0
    %77 = vmatprep.subr.mxu0 0.0
    %78 = vmatpush1.msra.mxu0 0.0
    %79 = vmatprep.subr.mxu0 0.0
    %80 = vmatpush1.msra.mxu0 0.0
    %81 = vmatprep.subr.mxu0 0.0
    %82 = vmatpush1.msra.mxu0 0.0
    %83 = vmatprep.subr.mxu0 0.0
    %84 = vmatpush1.msra.mxu0 0.0
    %85 = vmatprep.subr.mxu0 0.0
    %86 = vmatpush1.msra.mxu0 0.0
    %87 = vmatprep.subr.mxu0 0.0
    %88 = vmatpush1.msra.mxu0 0.0
    %89 = vmatprep.subr.mxu0 0.0
    %90 = vmatpush1.msra.mxu0 0.0
    %91 = vmatprep.subr.mxu0 0.0
    %92 = vmatpush1.msra.mxu0 0.0
    %93 = vmatprep.subr.mxu0 0.0
    %94 = vmatpush1.msra.mxu0 0.0
    %95 = vmatprep.subr.mxu0 0.0
    %96 = vmatpush1.msra.mxu0 0.0
    %97 = vmatprep.subr.mxu0 0.0
    %98 = vmatpush1.msra.mxu0 0.0
    %99 = vmatprep.subr.mxu0 0.0
    %100 = vmatpush1.msra.mxu0 0.0
    %101 = vmatprep.subr.mxu0 0.0
    %102 = vmatpush1.msra.mxu0 0.0
    %103 = vmatprep.subr.mxu0 0.0
    %104 = vmatpush1.msra.mxu0 0.0
    %105 = vmatprep.subr.mxu0 0.0
    %106 = vmatpush1.msra.mxu0 0.0
    %107 = vmatprep.subr.mxu0 0.0
    %108 = vmatpush1.msra.mxu0 0.0
    %109 = vmatprep.subr.mxu0 0.0
    %110 = vmatpush1.msra.mxu0 0.0
    %111 = vmatprep.subr.mxu0 0.0
    %112 = vmatpush1.msra.mxu0 0.0
    %113 = vmatprep.subr.mxu0 0.0
    %114 = vmatpush1.msra.mxu0 0.0
    %115 = vmatprep.subr.mxu0 0.0
    %116 = vmatpush1.msra.mxu0 0.0
    %117 = vmatprep.mubr.f32.mxu0 0.0
    %118 = vmatmul.mubr.f32.gmra.mrb[0].mxu0 %v48
    %v119 = vpop.f32.mrb[0].mxu0
    %v120 = vadd.f32 %v44, %v119
    %v121 = vpop.f32.mrb[0].mxu0
    %122 = vmatprep.mubr.f32.mxu0 0.0
    %123 = vmatmul.mubr.f32.gmra.mrb[0].mxu0 %v51
    %v124 = vpop.f32.mrb[0].mxu0
    %v125 = vadd.f32 %v44, %v124
    %v126 = vpop.f32.mrb[0].mxu0
    %127 = vdwg.mxu0
    %vm128 = vcmask 523264
    %v129 = vsel %vm128, %v120, 0.0
    %130 = vadd.xlane.f32.xlu0 %v129
    %v131 = vpop.xlane.xlu0 %130
    %v132 = vsel %vm128, %v125, 0.0
    %133 = vadd.xlane.f32.xlu0 %v132
    %v134 = vpop.xlane.xlu0 %133
    %v135 = vrcp.pop 64.0
    %v136 = vmul.f32 %v131, %v135
    %v137 = vmul.f32 %v134, %v135
    %v138 = vsub.f32 %v120, %v136
    %v139 = vsub.f32 %v125, %v137
    %v140 = vmul.f32 %v138, %v138
    %v141 = vmul.f32 %v139, %v139
    %v142 = vsel %vm128, %v140, 0.0
    %143 = vadd.xlane.f32.xlu0 %v142
    %v144 = vpop.xlane.xlu0 %143
    %v145 = vsel %vm128, %v141, 0.0
    %146 = vadd.xlane.f32.xlu0 %v145
    %v147 = vpop.xlane.xlu0 %146
    %v148 = vmul.f32 %v144, %v135
    %v149 = vmul.f32 %v147, %v135
    %v150 = vadd.f32 %v148, 1e-05
    %v151 = vadd.f32 %v149, 1e-05
    %v152 = vrsqrt.pop %v150
    %v153 = vrsqrt.pop %v151
    %v154 = vmul.f32 %v138, %v152
    %v155 = vmul.f32 %v139, %v153
    %v156 = vld [vmem:[%s3] sm:$0x1]
    %v158 = vlaneseq
    %v159 = vshrl.u32 %v158, 7
    %v160 = vsub.s32 0, %v159
    %v161 = vrot.slane %v156, %v160
    %v163 = vmul.f32 %v154, %v161
    %v164 = vmul.f32 %v155, %v161
    %v165 = vld [vmem:[%s4] sm:$0x1]
    %v167 = vlaneseq
    %v168 = vshrl.u32 %v167, 7
    %v169 = vsub.s32 0, %v168
    %v170 = vrot.slane %v165, %v169
    %v172 = vadd.f32 %v163, %v170
    %v173 = vadd.f32 %v164, %v170
    %v174 = vmul.f32 %v172, 0.5
    %v175 = vmul.f32 %v173, 0.5
    %v176 = vmul.f32 %v172, 0.70710677
    %v177 = vmul.f32 %v173, 0.70710677
    %v178 = verf.f32.pop %v176
    %v179 = verf.f32.pop %v177
    %v180 = vadd.f32 %v178, 1.0
    %v181 = vadd.f32 %v179, 1.0
    %v182 = vmul.f32 %v174, %v180
    %v183 = vmul.f32 %v175, %v181
    %v184 = vld [vmem:[%s5] sm:$0xff]
    %v185 = vld [vmem:[%s5 + $0x8] sm:$0xff]
    %v186 = vld [vmem:[%s5 + $0x10] sm:$0xff]
    %v187 = vld [vmem:[%s5 + $0x18] sm:$0xff]
    %v188 = vld [vmem:[%s5 + $0x20] sm:$0xff]
    %v189 = vld [vmem:[%s5 + $0x28] sm:$0xff]
    %v190 = vld [vmem:[%s5 + $0x30] sm:$0xff]
    %v191 = vld [vmem:[%s5 + $0x38] sm:$0xff]
    %v192 = vld [vmem:[%s6] sm:$0x1]
    %v194 = vlaneseq
    %v195 = vshrl.u32 %v194, 7
    %v196 = vsub.s32 0, %v195
    %v197 = vrot.slane %v192, %v196
    %v200 = vsel %vm128, %v182, 0
    %v203 = vsel %vm128, %v183, 0
    %205 = vmatprep.subr.mxu0 0.0
    %206 = vmatpush1.msra.mxu0 %v184
    %207 = vmatprep.subr.mxu0 0.0
    %208 = vmatpush1.msra.mxu0 %v185
    %209 = vmatprep.subr.mxu0 0.0
    %210 = vmatpush1.msra.mxu0 %v186
    %211 = vmatprep.subr.mxu0 0.0
    %212 = vmatpush1.msra.mxu0 %v187
    %213 = vmatprep.subr.mxu0 0.0
    %214 = vmatpush1.msra.mxu0 %v188
    %215 = vmatprep.subr.mxu0 0.0
    %216 = vmatpush1.msra.mxu0 %v189
    %217 = vmatprep.subr.mxu0 0.0
    %218 = vmatpush1.msra.mxu0 %v190
    %219 = vmatprep.subr.mxu0 0.0
    %220 = vmatpush1.msra.mxu0 %v191
    %221 = vmatprep.subr.mxu0 0.0
    %222 = vmatpush1.msra.mxu0 0.0
    %223 = vmatprep.subr.mxu0 0.0
    %224 = vmatpush1.msra.mxu0 0.0
    %225 = vmatprep.subr.mxu0 0.0
    %226 = vmatpush1.msra.mxu0 0.0
    %227 = vmatprep.subr.mxu0 0.0
    %228 = vmatpush1.msra.mxu0 0.0
    %229 = vmatprep.subr.mxu0 0.0
    %230 = vmatpush1.msra.mxu0 0.0
    %231 = vmatprep.subr.mxu0 0.0
    %232 = vmatpush1.msra.mxu0 0.0
    %233 = vmatprep.subr.mxu0 0.0
    %234 = vmatpush1.msra.mxu0 0.0
    %235 = vmatprep.subr.mxu0 0.0
    %236 = vmatpush1.msra.mxu0 0.0
    %237 = vmatprep.subr.mxu0 0.0
    %238 = vmatpush1.msra.mxu0 0.0
    %239 = vmatprep.subr.mxu0 0.0
    %240 = vmatpush1.msra.mxu0 0.0
    %241 = vmatprep.subr.mxu0 0.0
    %242 = vmatpush1.msra.mxu0 0.0
    %243 = vmatprep.subr.mxu0 0.0
    %244 = vmatpush1.msra.mxu0 0.0
    %245 = vmatprep.subr.mxu0 0.0
    %246 = vmatpush1.msra.mxu0 0.0
    %247 = vmatprep.subr.mxu0 0.0
    %248 = vmatpush1.msra.mxu0 0.0
    %249 = vmatprep.subr.mxu0 0.0
    %250 = vmatpush1.msra.mxu0 0.0
    %251 = vmatprep.subr.mxu0 0.0
    %252 = vmatpush1.msra.mxu0 0.0
    %253 = vmatprep.subr.mxu0 0.0
    %254 = vmatpush1.msra.mxu0 0.0
    %255 = vmatprep.subr.mxu0 0.0
    %256 = vmatpush1.msra.mxu0 0.0
    %257 = vmatprep.subr.mxu0 0.0
    %258 = vmatpush1.msra.mxu0 0.0
    %259 = vmatprep.subr.mxu0 0.0
    %260 = vmatpush1.msra.mxu0 0.0
    %261 = vmatprep.subr.mxu0 0.0
    %262 = vmatpush1.msra.mxu0 0.0
    %263 = vmatprep.subr.mxu0 0.0
    %264 = vmatpush1.msra.mxu0 0.0
    %265 = vmatprep.subr.mxu0 0.0
    %266 = vmatpush1.msra.mxu0 0.0
    %267 = vmatprep.subr.mxu0 0.0
    %268 = vmatpush1.msra.mxu0 0.0
    %269 = vmatprep.mubr.f32.mxu0 0.0
    %270 = vmatmul.mubr.f32.gmra.mrb[0].mxu0 %v200
    %v271 = vpop.f32.mrb[0].mxu0
    %v272 = vadd.f32 %v197, %v271
    %v273 = vpop.f32.mrb[0].mxu0
    %274 = vmatprep.mubr.f32.mxu0 0.0
    %275 = vmatmul.mubr.f32.gmra.mrb[0].mxu0 %v203
    %v276 = vpop.f32.mrb[0].mxu0
    %v277 = vadd.f32 %v197, %v276
    %v278 = vpop.f32.mrb[0].mxu0
    %279 = vdwg.mxu0
    %v280 = vmul.f32 %v272, 0.5
    %v281 = vmul.f32 %v277, 0.5
    %v282 = vmul.f32 %v272, 0.70710677
    %v283 = vmul.f32 %v277, 0.70710677
    %v284 = verf.f32.pop %v282
    %v285 = verf.f32.pop %v283
    %v286 = vadd.f32 %v284, 1.0
    %v287 = vadd.f32 %v285, 1.0
    %v288 = vmul.f32 %v280, %v286
    %v289 = vmul.f32 %v281, %v287
    %v290 = vld [vmem:[%s7] sm:$0xff]
    %v291 = vld [vmem:[%s7 + $0x8] sm:$0xff]
    %v292 = vld [vmem:[%s7 + $0x10] sm:$0xff]
    %v293 = vld [vmem:[%s7 + $0x18] sm:$0xff]
    %v294 = vld [vmem:[%s7 + $0x20] sm:$0xff]
    %v295 = vld [vmem:[%s7 + $0x28] sm:$0xff]
    %v296 = vld [vmem:[%s7 + $0x30] sm:$0xff]
    %v297 = vld [vmem:[%s7 + $0x38] sm:$0xff]
    %v298 = vld [vmem:[%s8] sm:$0x1]
    %v300 = vlaneseq
    %v301 = vshrl.u32 %v300, 7
    %v302 = vsub.s32 0, %v301
    %v303 = vrot.slane %v298, %v302
    %v306 = vsel %vm128, %v288, 0
    %v309 = vsel %vm128, %v289, 0
    %311 = vmatprep.subr.mxu0 0.0
    %312 = vmatpush1.msra.mxu0 %v290
    %313 = vmatprep.subr.mxu0 0.0
    %314 = vmatpush1.msra.mxu0 %v291
    %315 = vmatprep.subr.mxu0 0.0
    %316 = vmatpush1.msra.mxu0 %v292
    %317 = vmatprep.subr.mxu0 0.0
    %318 = vmatpush1.msra.mxu0 %v293
    %319 = vmatprep.subr.mxu0 0.0
    %320 = vmatpush1.msra.mxu0 %v294
    %321 = vmatprep.subr.mxu0 0.0
    %322 = vmatpush1.msra.mxu0 %v295
    %323 = vmatprep.subr.mxu0 0.0
    %324 = vmatpush1.msra.mxu0 %v296
    %325 = vmatprep.subr.mxu0 0.0
    %326 = vmatpush1.msra.mxu0 %v297
    %327 = vmatprep.subr.mxu0 0.0
    %328 = vmatpush1.msra.mxu0 0.0
    %329 = vmatprep.subr.mxu0 0.0
    %330 = vmatpush1.msra.mxu0 0.0
    %331 = vmatprep.subr.mxu0 0.0
    %332 = vmatpush1.msra.mxu0 0.0
    %333 = vmatprep.subr.mxu0 0.0
    %334 = vmatpush1.msra.mxu0 0.0
    %335 = vmatprep.subr.mxu0 0.0
    %336 = vmatpush1.msra.mxu0 0.0
    %337 = vmatprep.subr.mxu0 0.0
    %338 = vmatpush1.msra.mxu0 0.0
    %339 = vmatprep.subr.mxu0 0.0
    %340 = vmatpush1.msra.mxu0 0.0
    %341 = vmatprep.subr.mxu0 0.0
    %342 = vmatpush1.msra.mxu0 0.0
    %343 = vmatprep.subr.mxu0 0.0
    %344 = vmatpush1.msra.mxu0 0.0
    %345 = vmatprep.subr.mxu0 0.0
    %346 = vmatpush1.msra.mxu0 0.0
    %347 = vmatprep.subr.mxu0 0.0
    %348 = vmatpush1.msra.mxu0 0.0
    %349 = vmatprep.subr.mxu0 0.0
    %350 = vmatpush1.msra.mxu0 0.0
    %351 = vmatprep.subr.mxu0 0.0
    %352 = vmatpush1.msra.mxu0 0.0
    %353 = vmatprep.subr.mxu0 0.0
    %354 = vmatpush1.msra.mxu0 0.0
    %355 = vmatprep.subr.mxu0 0.0
    %356 = vmatpush1.msra.mxu0 0.0
    %357 = vmatprep.subr.mxu0 0.0
    %358 = vmatpush1.msra.mxu0 0.0
    %359 = vmatprep.subr.mxu0 0.0
    %360 = vmatpush1.msra.mxu0 0.0
    %361 = vmatprep.subr.mxu0 0.0
    %362 = vmatpush1.msra.mxu0 0.0
    %363 = vmatprep.subr.mxu0 0.0
    %364 = vmatpush1.msra.mxu0 0.0
    %365 = vmatprep.subr.mxu0 0.0
    %366 = vmatpush1.msra.mxu0 0.0
    %367 = vmatprep.subr.mxu0 0.0
    %368 = vmatpush1.msra.mxu0 0.0
    %369 = vmatprep.subr.mxu0 0.0
    %370 = vmatpush1.msra.mxu0 0.0
    %371 = vmatprep.subr.mxu0 0.0
    %372 = vmatpush1.msra.mxu0 0.0
    %373 = vmatprep.subr.mxu0 0.0
    %374 = vmatpush1.msra.mxu0 0.0
    %375 = vmatprep.mubr.f32.mxu0 0.0
    %376 = vmatmul.mubr.f32.gmra.mrb[0].mxu0 %v306
    %v377 = vpop.f32.mrb[0].mxu0
    %v378 = vadd.f32 %v303, %v377
    %v379 = vpop.f32.mrb[0].mxu0
    %380 = vmatprep.mubr.f32.mxu0 0.0
    %381 = vmatmul.mubr.f32.gmra.mrb[0].mxu0 %v309
    %v382 = vpop.f32.mrb[0].mxu0
    %v383 = vadd.f32 %v303, %v382
    %v384 = vpop.f32.mrb[0].mxu0
    %385 = vdwg.mxu0
    %386 = vst [vmem:[#allocation2] sm:$0xff] %v378
    %387 = vst [vmem:[#allocation2 + $0x8] sm:$0xff] %v383
    // Predicated region
    $region38: #{decoder_forward.1} parent=1 // pred_check
      _
    $region39: #{decoder_forward.1} parent=1 // pred_check_branch
      %389 = sbr.rel (0) target = $region41
    $region40: #{decoder_forward.1} parent=1 // pred_region
      %s391 = ssub.s32 256, 256
      %392 = vsyncadd [#allocation3], %s391
      %s393 = sshll.u32 [#allocation2], 4
      %s394 = int_to_ptr.vmem [resolvable:$true] %s393
      %399 = dma.vmem_to_hbm [thread:$0]  %s394, 256, %s9, [#allocation3], 128, 128, 8
    $region41: #{decoder_forward.1} parent=1 // pred_fallthru
      _
    // Predicated region
    $region42: #{decoder_forward.1} parent=1 // pred_check
      _
    $region43: #{decoder_forward.1} parent=1 // pred_check_branch
      %401 = sbr.rel (0) target = $region45
    $region44: #{decoder_forward.1} parent=1 // pred_region
      %402 = dma.done [#allocation3], 256
    $region45: #{decoder_forward.1} parent=1 // pred_fallthru
      _
    %403 = vsyncpa [#allocation3], 1

</llo_original>
